<compile_context>
chip_gen: v6e
topology: v6e:2x2x1
jax: 0.10.0
libtpu: 0.0.40
codegen_flags: <defaults>
</compile_context>

<pallas_src>
from functools import partial

import jax
import jax.numpy as jnp
from jax.experimental import pallas as pl
from jax.experimental.pallas import tpu as pltpu


def _atom_ref_kernel(node_type_ref, graph_id_ref, poff_ref, out_ref, acc_ref):
    t = pl.program_id(0)

    # Zero the resident composition accumulator at the first node tile.
    @pl.when(t == 0)
    def _():
        acc_ref[...] = jnp.zeros_like(acc_ref)

    nt = node_type_ref[...]          # (TILE_N, 1) int32, nodes on sublane axis
    gid = graph_id_ref[...]          # (1, TILE_N) int32, nodes on lane axis

    tile_n = nt.shape[0]
    g_pad, z_pad = acc_ref.shape

    # one_hot[n, z] = (node_type[n] == z)  -> (TILE_N, Z_pad), exact 0/1 in bf16.
    z_iota = jax.lax.broadcasted_iota(jnp.int32, (tile_n, z_pad), 1)
    one_hot = (nt == z_iota).astype(jnp.bfloat16)

    # member[g, n] = (graph_id[n] == g)    -> (G_pad, TILE_N), exact 0/1 in bf16.
    g_iota = jax.lax.broadcasted_iota(jnp.int32, (g_pad, tile_n), 0)
    member = (gid == g_iota).astype(jnp.bfloat16)

    # Composition counts per (graph, element): single lane-dense MXU pass, f32 accumulate.
    acc_ref[...] += jnp.dot(member, one_hot, preferred_element_type=jnp.float32)

    # Epilogue: contract counts against the f32 elemental offsets over Z.
    @pl.when(t == pl.num_programs(0) - 1)
    def _():
        poff = poff_ref[...]         # (1, Z_pad) float32
        # out[0, g] = sum_z poff[0, z] * acc[g, z]   -> (1, G_pad), lane-major output.
        out_ref[...] = jax.lax.dot_general(
            poff,
            acc_ref[...],
            dimension_numbers=(((1,), (1,)), ((), ())),
            preferred_element_type=jnp.float32,
        )


@partial(jax.jit, static_argnames=("num_graphs", "tile_n", "z_pad", "g_pad"))
def atom_ref_forward(node_type, graph_id, property_offset, *, num_graphs,
                     tile_n=512, z_pad=128, g_pad=8):
    """Pallas AtomRef forward.

    node_type:       (N,)     int32  atomic number per node
    graph_id:        (N,)     int32  graph index per node (batched graph membership)
    property_offset: (max_z,) float32 fitted elemental reference values
    Returns: (num_graphs,) float32 total property offset per graph
    """
    n = node_type.shape[0]
    max_z = property_offset.shape[0]
    assert max_z <= z_pad, "increase z_pad"
    assert num_graphs <= g_pad, "increase g_pad"

    # Pad node axis up to a multiple of the node tile. Pad values are -1 so padded
    # nodes match neither any element row nor any graph row (contribute exactly 0).
    n_tiles = max(1, (n + tile_n - 1) // tile_n)
    n_pad = n_tiles * tile_n

    nt_p = jnp.full((n_pad, 1), -1, dtype=jnp.int32).at[:n, 0].set(
        node_type.astype(jnp.int32))
    gid_p = jnp.full((1, n_pad), -1, dtype=jnp.int32).at[0, :n].set(
        graph_id.astype(jnp.int32))
    poff_p = jnp.zeros((1, z_pad), dtype=jnp.float32).at[0, :max_z].set(
        property_offset.astype(jnp.float32))

    out = pl.pallas_call(
        _atom_ref_kernel,
        out_shape=jax.ShapeDtypeStruct((1, g_pad), jnp.float32),
        grid=(n_tiles,),
        in_specs=[
            pl.BlockSpec((tile_n, 1), lambda t: (t, 0)),   # node_type tile
            pl.BlockSpec((1, tile_n), lambda t: (0, t)),   # graph_id tile
            pl.BlockSpec((1, z_pad), lambda t: (0, 0)),    # property_offset (resident)
        ],
        out_specs=pl.BlockSpec((1, g_pad), lambda t: (0, 0)),  # resident output
        scratch_shapes=[pltpu.VMEM((g_pad, z_pad), jnp.float32)],
        compiler_params=pltpu.CompilerParams(
            dimension_semantics=("arbitrary",)),   # node axis is a reduction
    )(nt_p, gid_p, poff_p)

    return out[0, :num_graphs]


if __name__ == "__main__":
    key = jax.random.PRNGKey(0)
    k1, k2 = jax.random.split(key, 2)

    max_z = 89          # default max atomic number in AtomRef
    num_graphs = 2      # batch of 2 graphs
    nodes_per_graph = [10, 14]
    n_nodes = sum(nodes_per_graph)

    # Deterministic "fitted" elemental reference energies.
    property_offset = jax.random.normal(k1, (max_z,), dtype=jnp.float32)

    # Node atomic numbers and graph membership (batched DGL graph equivalent).
    node_type = jax.random.randint(k2, (n_nodes,), 0, max_z, dtype=jnp.int32)
    graph_id = jnp.concatenate([
        jnp.full((nodes_per_graph[0],), 0, dtype=jnp.int32),
        jnp.full((nodes_per_graph[1],), 1, dtype=jnp.int32),
    ])

    out = atom_ref_forward(node_type, graph_id, property_offset, num_graphs=num_graphs)
    out = jax.block_until_ready(out)

    # Pure-JAX reference: gather + segment sum (== one_hot * offset summed, then readout_nodes).
    per_node_ref = property_offset[node_type]
    ref = jax.ops.segment_sum(per_node_ref, graph_id, num_segments=num_graphs)

    assert out.shape == (num_graphs,)
    assert jnp.allclose(out, ref, rtol=1e-5, atol=1e-5), (out, ref)
    print("KERNEL_OK")
</pallas_src>

<mosaic_0001>
module attributes {stable_mosaic.version = 11 : i64} {
  func.func @_atom_ref_kernel(%arg0: i32, %arg1: memref<512x1xi32, #tpu.memory_space<vmem>>, %arg2: memref<1x512xi32, #tpu.memory_space<vmem>>, %arg3: memref<1x128xf32, #tpu.memory_space<vmem>>, %arg4: memref<1x8xf32, #tpu.memory_space<vmem>>, %arg5: memref<8x128xf32, #tpu.memory_space<vmem>>) attributes {dimension_semantics = [#tpu.dimension_semantics<arbitrary>], iteration_bounds = array<i64: 1>, scalar_prefetch = 0 : i64, scratch_operands = 1 : i64, tpu.core_type = #tpu.core_type<tc>, window_params = [{transform_indices = @transform_0, window_bounds = array<i64: 512, 1>}, {transform_indices = @transform_1, window_bounds = array<i64: 1, 512>}, {pipeline_mode = #tpu.pipeline_mode<synchronous>, transform_indices = @transform_2, window_bounds = array<i64: 1, 128>}, {pipeline_mode = #tpu.pipeline_mode<synchronous>, transform_indices = @transform_3, window_bounds = array<i64: 1, 8>}]} {
    %c0_i32 = arith.constant 0 : i32
    %0 = arith.cmpi eq, %arg0, %c0_i32 : i32
    %1 = arith.extui %0 : i1 to i32
    %c0_i32_0 = arith.constant 0 : i32
    %2 = arith.cmpi ne, %1, %c0_i32_0 : i32
    scf.if %2 {
      %cst_10 = arith.constant 0.000000e+00 : f32
      %24 = vector.broadcast %cst_10 : f32 to vector<8x128xf32>
      %c0_11 = arith.constant 0 : index
      %c0_12 = arith.constant 0 : index
      %25 = vector.load %arg5[%c0_11, %c0_12] : memref<8x128xf32, #tpu.memory_space<vmem>>, vector<8x128xf32>
      tpu.vector_store %arg5[%c0_11, %c0_12], %24 {strides = array<i32>} : memref<8x128xf32, #tpu.memory_space<vmem>>, vector<8x128xf32>,
    } else {
    }
    %c0 = arith.constant 0 : index
    %c0_1 = arith.constant 0 : index
    %3 = vector.load %arg1[%c0, %c0_1] : memref<512x1xi32, #tpu.memory_space<vmem>>, vector<512x1xi32>
    %c0_2 = arith.constant 0 : index
    %c0_3 = arith.constant 0 : index
    %4 = vector.load %arg2[%c0_2, %c0_3] : memref<1x512xi32, #tpu.memory_space<vmem>>, vector<1x512xi32>
    %5 = tpu.iota {dimensions = array<i32: 1>} : vector<512x128xi32>
    %6 = vector.broadcast %3 : vector<512x1xi32> to vector<512x128xi32>
    %7 = arith.cmpi eq, %6, %5 : vector<512x128xi32>
    %8 = arith.extui %7 : vector<512x128xi1> to vector<512x128xi32>
    %9 = arith.sitofp %8 : vector<512x128xi32> to vector<512x128xf32>
    %10 = arith.truncf %9 : vector<512x128xf32> to vector<512x128xbf16>
    %11 = tpu.iota {dimensions = array<i32: 0>} : vector<8x512xi32>
    %12 = vector.broadcast %4 : vector<1x512xi32> to vector<8x512xi32>
    %13 = arith.cmpi eq, %12, %11 : vector<8x512xi32>
    %14 = arith.extui %13 : vector<8x512xi1> to vector<8x512xi32>
    %15 = arith.sitofp %14 : vector<8x512xi32> to vector<8x512xf32>
    %16 = arith.truncf %15 : vector<8x512xf32> to vector<8x512xbf16>
    %c0_4 = arith.constant 0 : index
    %c0_5 = arith.constant 0 : index
    %17 = vector.load %arg5[%c0_4, %c0_5] : memref<8x128xf32, #tpu.memory_space<vmem>>, vector<8x128xf32>
    %cst = arith.constant dense<0.000000e+00> : vector<8x128xf32>
    %18 = tpu.matmul %16, %10, %cst {dimension_numbers = #tpu.dot_dimension_numbers<[1], [0], [0], [1], [0, 0, 1, 1], [], []>} : vector<8x512xbf16>, vector<512x128xbf16>, vector<8x128xf32> -> vector<8x128xf32>
    %19 = arith.addf %17, %18 : vector<8x128xf32>
    %c0_6 = arith.constant 0 : index
    %c0_7 = arith.constant 0 : index
    %20 = vector.load %arg5[%c0_6, %c0_7] : memref<8x128xf32, #tpu.memory_space<vmem>>, vector<8x128xf32>
    tpu.vector_store %arg5[%c0_6, %c0_7], %19 {strides = array<i32>} : memref<8x128xf32, #tpu.memory_space<vmem>>, vector<8x128xf32>,
    %c0_i32_8 = arith.constant 0 : i32
    %21 = arith.cmpi eq, %arg0, %c0_i32_8 : i32
    %22 = arith.extui %21 : i1 to i32
    %c0_i32_9 = arith.constant 0 : i32
    %23 = arith.cmpi ne, %22, %c0_i32_9 : i32
    scf.if %23 {
      %c0_10 = arith.constant 0 : index
      %c0_11 = arith.constant 0 : index
      %24 = vector.load %arg3[%c0_10, %c0_11] : memref<1x128xf32, #tpu.memory_space<vmem>>, vector<1x128xf32>
      %c0_12 = arith.constant 0 : index
      %c0_13 = arith.constant 0 : index
      %25 = vector.load %arg5[%c0_12, %c0_13] : memref<8x128xf32, #tpu.memory_space<vmem>>, vector<8x128xf32>
      %cst_14 = arith.constant dense<0.000000e+00> : vector<1x8xf32>
      %26 = tpu.matmul %24, %25, %cst_14 {dimension_numbers = #tpu.dot_dimension_numbers<[1], [1], [0], [0], [0, 0, 1, 0], [], []>} : vector<1x128xf32>, vector<8x128xf32>, vector<1x8xf32> -> vector<1x8xf32>
      %c0_15 = arith.constant 0 : index
      %c0_16 = arith.constant 0 : index
      %27 = vector.load %arg4[%c0_15, %c0_16] : memref<1x8xf32, #tpu.memory_space<vmem>>, vector<1x8xf32>
      tpu.vector_store %arg4[%c0_15, %c0_16], %26 {strides = array<i32>} : memref<1x8xf32, #tpu.memory_space<vmem>>, vector<1x8xf32>,
    } else {
    }
    return
  }
  func.func @transform_0(%arg0: i32) -> (i32, i32) {
    %c0_i32 = arith.constant 0 : i32
    %c0_i32_0 = arith.constant 0 : i32
    return %arg0, %c0_i32 : i32, i32
  }
  func.func @transform_1(%arg0: i32) -> (i32, i32) {
    %c0_i32 = arith.constant 0 : i32
    %c0_i32_0 = arith.constant 0 : i32
    return %c0_i32, %arg0 : i32, i32
  }
  func.func @transform_2(%arg0: i32) -> (i32, i32) {
    %c0_i32 = arith.constant 0 : i32
    %c0_i32_0 = arith.constant 0 : i32
    %c0_i32_1 = arith.constant 0 : i32
    return %c0_i32, %c0_i32_0 : i32, i32
  }
  func.func @transform_3(%arg0: i32) -> (i32, i32) {
    %c0_i32 = arith.constant 0 : i32
    %c0_i32_0 = arith.constant 0 : i32
    %c0_i32_1 = arith.constant 0 : i32
    return %c0_i32, %c0_i32_0 : i32, i32
  }
}

</mosaic_0001>

<llo_original>
// kernel: atom_ref_forward.1
$region0: #{atom_ref_forward.1}
  #allocation0 [shape = 'u32[]', space=smem, size = 0x4, offset = 0x4, fixed_abs, tag = 'smem constant byte address 0x4 - core index']
  #allocation1 [shape = 'u32[144,128]{1,0:T(1,128)}', space=vmem, size = 0x12000, scoped, tag = 'internal scratch']
  #allocation2 [shape = 'f32[8,128]{1,0:T(8,128)}', space=vmem, size = 0x1000, scoped, tag = 'scratch operand']
  %s0 = inlined_call_operand.vmem [shape: s32[512,1], index: 0, kind: input, shape index: {}]
  %s1 = inlined_call_operand.vmem [shape: s32[1,512], index: 1, kind: input, shape index: {}]
  %s2 = inlined_call_operand.vmem [shape: f32[1,128], index: 2, kind: input, shape index: {}]
  %s3 = inlined_call_operand.vmem [shape: f32[1,8], index: 3, kind: output, shape index: {}]
  %s4 = sld [smem:[#allocation0]]
  $region30: #{atom_ref_forward.1} parent=0
    _
  %s6 = ssub.s32 1, %s4
  %s7 = scalar_select 0, %s6, %s4
  // Predicated region
  $region2: #{atom_ref_forward.1} parent=0 // pred_check
    _
  $region3: #{atom_ref_forward.1} parent=0 // pred_check_branch
    %9 = sbr.rel (0) target = $region5
  $region4: #{atom_ref_forward.1} parent=0 // pred_region
    _
  $region5: #{atom_ref_forward.1} parent=0 // pred_fallthru
    _
  // Predicated region
  $region6: #{atom_ref_forward.1} parent=0 // pred_check
    _
  $region7: #{atom_ref_forward.1} parent=0 // pred_check_branch
    %11 = sbr.rel (0) target = $region9
  $region8: #{atom_ref_forward.1} parent=0 // pred_region
    _
  $region9: #{atom_ref_forward.1} parent=0 // pred_fallthru
    _
  // Predicated region
  $region10: #{atom_ref_forward.1} parent=0 // pred_check
    _
  $region11: #{atom_ref_forward.1} parent=0 // pred_check_branch
    %13 = sbr.rel (0) target = $region13
  $region12: #{atom_ref_forward.1} parent=0 // pred_region
    _
  $region13: #{atom_ref_forward.1} parent=0 // pred_fallthru
    _
  %p15 = scmp.eq.s32.totalorder 0, 0
  // Predicated region
  $region14: #{atom_ref_forward.1} parent=0 // pred_check
    %p16 = pneg %p15
  $region15: #{atom_ref_forward.1} parent=0 // pred_check_branch
    %18 = sbr.rel (%p16) target = $region17
  $region16: #{atom_ref_forward.1} parent=0 // pred_region
    %19 = vst [vmem:[#allocation2] sm:$0xff] 0.0
  $region17: #{atom_ref_forward.1} parent=0 // pred_fallthru
    _
  %v20 = vld [vmem:[%s0] sm:$0xff]
  %v21 = vld [vmem:[%s0 + $0x8] sm:$0xff]
  %v22 = vld [vmem:[%s0 + $0x10] sm:$0xff]
  %v23 = vld [vmem:[%s0 + $0x18] sm:$0xff]
  %v24 = vld [vmem:[%s0 + $0x20] sm:$0xff]
  %v25 = vld [vmem:[%s0 + $0x28] sm:$0xff]
  %v26 = vld [vmem:[%s0 + $0x30] sm:$0xff]
  %v27 = vld [vmem:[%s0 + $0x38] sm:$0xff]
  %v28 = vld [vmem:[%s0 + $0x40] sm:$0xff]
  %v29 = vld [vmem:[%s0 + $0x48] sm:$0xff]
  %v30 = vld [vmem:[%s0 + $0x50] sm:$0xff]
  %v31 = vld [vmem:[%s0 + $0x58] sm:$0xff]
  %v32 = vld [vmem:[%s0 + $0x60] sm:$0xff]
  %v33 = vld [vmem:[%s0 + $0x68] sm:$0xff]
  %v34 = vld [vmem:[%s0 + $0x70] sm:$0xff]
  %v35 = vld [vmem:[%s0 + $0x78] sm:$0xff]
  %v36 = vld [vmem:[%s0 + $0x80] sm:$0xff]
  %v37 = vld [vmem:[%s0 + $0x88] sm:$0xff]
  %v38 = vld [vmem:[%s0 + $0x90] sm:$0xff]
  %v39 = vld [vmem:[%s0 + $0x98] sm:$0xff]
  %v40 = vld [vmem:[%s0 + $0xa0] sm:$0xff]
  %v41 = vld [vmem:[%s0 + $0xa8] sm:$0xff]
  %v42 = vld [vmem:[%s0 + $0xb0] sm:$0xff]
  %v43 = vld [vmem:[%s0 + $0xb8] sm:$0xff]
  %v44 = vld [vmem:[%s0 + $0xc0] sm:$0xff]
  %v45 = vld [vmem:[%s0 + $0xc8] sm:$0xff]
  %v46 = vld [vmem:[%s0 + $0xd0] sm:$0xff]
  %v47 = vld [vmem:[%s0 + $0xd8] sm:$0xff]
  %v48 = vld [vmem:[%s0 + $0xe0] sm:$0xff]
  %v49 = vld [vmem:[%s0 + $0xe8] sm:$0xff]
  %v50 = vld [vmem:[%s0 + $0xf0] sm:$0xff]
  %v51 = vld [vmem:[%s0 + $0xf8] sm:$0xff]
  %v52 = vld [vmem:[%s0 + $0x100] sm:$0xff]
  %v53 = vld [vmem:[%s0 + $0x108] sm:$0xff]
  %v54 = vld [vmem:[%s0 + $0x110] sm:$0xff]
  %v55 = vld [vmem:[%s0 + $0x118] sm:$0xff]
  %v56 = vld [vmem:[%s0 + $0x120] sm:$0xff]
  %v57 = vld [vmem:[%s0 + $0x128] sm:$0xff]
  %v58 = vld [vmem:[%s0 + $0x130] sm:$0xff]
  %v59 = vld [vmem:[%s0 + $0x138] sm:$0xff]
  %v60 = vld [vmem:[%s0 + $0x140] sm:$0xff]
  %v61 = vld [vmem:[%s0 + $0x148] sm:$0xff]
  %v62 = vld [vmem:[%s0 + $0x150] sm:$0xff]
  %v63 = vld [vmem:[%s0 + $0x158] sm:$0xff]
  %v64 = vld [vmem:[%s0 + $0x160] sm:$0xff]
  %v65 = vld [vmem:[%s0 + $0x168] sm:$0xff]
  %v66 = vld [vmem:[%s0 + $0x170] sm:$0xff]
  %v67 = vld [vmem:[%s0 + $0x178] sm:$0xff]
  %v68 = vld [vmem:[%s0 + $0x180] sm:$0xff]
  %v69 = vld [vmem:[%s0 + $0x188] sm:$0xff]
  %v70 = vld [vmem:[%s0 + $0x190] sm:$0xff]
  %v71 = vld [vmem:[%s0 + $0x198] sm:$0xff]
  %v72 = vld [vmem:[%s0 + $0x1a0] sm:$0xff]
  %v73 = vld [vmem:[%s0 + $0x1a8] sm:$0xff]
  %v74 = vld [vmem:[%s0 + $0x1b0] sm:$0xff]
  %v75 = vld [vmem:[%s0 + $0x1b8] sm:$0xff]
  %v76 = vld [vmem:[%s0 + $0x1c0] sm:$0xff]
  %v77 = vld [vmem:[%s0 + $0x1c8] sm:$0xff]
  %v78 = vld [vmem:[%s0 + $0x1d0] sm:$0xff]
  %v79 = vld [vmem:[%s0 + $0x1d8] sm:$0xff]
  %v80 = vld [vmem:[%s0 + $0x1e0] sm:$0xff]
  %v81 = vld [vmem:[%s0 + $0x1e8] sm:$0xff]
  %v82 = vld [vmem:[%s0 + $0x1f0] sm:$0xff]
  %v83 = vld [vmem:[%s0 + $0x1f8] sm:$0xff]
  %v84 = vld [vmem:[%s1] sm:$0xf]
  %v85 = vlaneseq
  %v86 = vand.u32 %v85, 127
  %87 = vset.pattern.permute.xlu0 0
  %88 = vperm.xlu0 %87, %v20
  %v89 = vpop.permute.xlu0 %88
  %90 = vset.pattern.permute.xlu0 0
  %91 = vperm.xlu0 %90, %v21
  %v92 = vpop.permute.xlu0 %91
  %93 = vset.pattern.permute.xlu0 0
  %94 = vperm.xlu0 %93, %v22
  %v95 = vpop.permute.xlu0 %94
  %96 = vset.pattern.permute.xlu0 0
  %97 = vperm.xlu0 %96, %v23
  %v98 = vpop.permute.xlu0 %97
  %99 = vset.pattern.permute.xlu0 0
  %100 = vperm.xlu0 %99, %v24
  %v101 = vpop.permute.xlu0 %100
  %102 = vset.pattern.permute.xlu0 0
  %103 = vperm.xlu0 %102, %v25
  %v104 = vpop.permute.xlu0 %103
  %105 = vset.pattern.permute.xlu0 0
  %106 = vperm.xlu0 %105, %v26
  %v107 = vpop.permute.xlu0 %106
  %108 = vset.pattern.permute.xlu0 0
  %109 = vperm.xlu0 %108, %v27
  %v110 = vpop.permute.xlu0 %109
  %111 = vset.pattern.permute.xlu0 0
  %112 = vperm.xlu0 %111, %v28
  %v113 = vpop.permute.xlu0 %112
  %114 = vset.pattern.permute.xlu0 0
  %115 = vperm.xlu0 %114, %v29
  %v116 = vpop.permute.xlu0 %115
  %117 = vset.pattern.permute.xlu0 0
  %118 = vperm.xlu0 %117, %v30
  %v119 = vpop.permute.xlu0 %118
  %120 = vset.pattern.permute.xlu0 0
  %121 = vperm.xlu0 %120, %v31
  %v122 = vpop.permute.xlu0 %121
  %123 = vset.pattern.permute.xlu0 0
  %124 = vperm.xlu0 %123, %v32
  %v125 = vpop.permute.xlu0 %124
  %126 = vset.pattern.permute.xlu0 0
  %127 = vperm.xlu0 %126, %v33
  %v128 = vpop.permute.xlu0 %127
  %129 = vset.pattern.permute.xlu0 0
  %130 = vperm.xlu0 %129, %v34
  %v131 = vpop.permute.xlu0 %130
  %132 = vset.pattern.permute.xlu0 0
  %133 = vperm.xlu0 %132, %v35
  %v134 = vpop.permute.xlu0 %133
  %135 = vset.pattern.permute.xlu0 0
  %136 = vperm.xlu0 %135, %v36
  %v137 = vpop.permute.xlu0 %136
  %138 = vset.pattern.permute.xlu0 0
  %139 = vperm.xlu0 %138, %v37
  %v140 = vpop.permute.xlu0 %139
  %141 = vset.pattern.permute.xlu0 0
  %142 = vperm.xlu0 %141, %v38
  %v143 = vpop.permute.xlu0 %142
  %144 = vset.pattern.permute.xlu0 0
  %145 = vperm.xlu0 %144, %v39
  %v146 = vpop.permute.xlu0 %145
  %147 = vset.pattern.permute.xlu0 0
  %148 = vperm.xlu0 %147, %v40
  %v149 = vpop.permute.xlu0 %148
  %150 = vset.pattern.permute.xlu0 0
  %151 = vperm.xlu0 %150, %v41
  %v152 = vpop.permute.xlu0 %151
  %153 = vset.pattern.permute.xlu0 0
  %154 = vperm.xlu0 %153, %v42
  %v155 = vpop.permute.xlu0 %154
  %156 = vset.pattern.permute.xlu0 0
  %157 = vperm.xlu0 %156, %v43
  %v158 = vpop.permute.xlu0 %157
  %159 = vset.pattern.permute.xlu0 0
  %160 = vperm.xlu0 %159, %v44
  %v161 = vpop.permute.xlu0 %160
  %162 = vset.pattern.permute.xlu0 0
  %163 = vperm.xlu0 %162, %v45
  %v164 = vpop.permute.xlu0 %163
  %165 = vset.pattern.permute.xlu0 0
  %166 = vperm.xlu0 %165, %v46
  %v167 = vpop.permute.xlu0 %166
  %168 = vset.pattern.permute.xlu0 0
  %169 = vperm.xlu0 %168, %v47
  %v170 = vpop.permute.xlu0 %169
  %171 = vset.pattern.permute.xlu0 0
  %172 = vperm.xlu0 %171, %v48
  %v173 = vpop.permute.xlu0 %172
  %174 = vset.pattern.permute.xlu0 0
  %175 = vperm.xlu0 %174, %v49
  %v176 = vpop.permute.xlu0 %175
  %177 = vset.pattern.permute.xlu0 0
  %178 = vperm.xlu0 %177, %v50
  %v179 = vpop.permute.xlu0 %178
  %180 = vset.pattern.permute.xlu0 0
  %181 = vperm.xlu0 %180, %v51
  %v182 = vpop.permute.xlu0 %181
  %183 = vset.pattern.permute.xlu0 0
  %184 = vperm.xlu0 %183, %v52
  %v185 = vpop.permute.xlu0 %184
  %186 = vset.pattern.permute.xlu0 0
  %187 = vperm.xlu0 %186, %v53
  %v188 = vpop.permute.xlu0 %187
  %189 = vset.pattern.permute.xlu0 0
  %190 = vperm.xlu0 %189, %v54
  %v191 = vpop.permute.xlu0 %190
  %192 = vset.pattern.permute.xlu0 0
  %193 = vperm.xlu0 %192, %v55
  %v194 = vpop.permute.xlu0 %193
  %195 = vset.pattern.permute.xlu0 0
  %196 = vperm.xlu0 %195, %v56
  %v197 = vpop.permute.xlu0 %196
  %198 = vset.pattern.permute.xlu0 0
  %199 = vperm.xlu0 %198, %v57
  %v200 = vpop.permute.xlu0 %199
  %201 = vset.pattern.permute.xlu0 0
  %202 = vperm.xlu0 %201, %v58
  %v203 = vpop.permute.xlu0 %202
  %204 = vset.pattern.permute.xlu0 0
  %205 = vperm.xlu0 %204, %v59
  %v206 = vpop.permute.xlu0 %205
  %207 = vset.pattern.permute.xlu0 0
  %208 = vperm.xlu0 %207, %v60
  %v209 = vpop.permute.xlu0 %208
  %210 = vset.pattern.permute.xlu0 0
  %211 = vperm.xlu0 %210, %v61
  %v212 = vpop.permute.xlu0 %211
  %213 = vset.pattern.permute.xlu0 0
  %214 = vperm.xlu0 %213, %v62
  %v215 = vpop.permute.xlu0 %214
  %216 = vset.pattern.permute.xlu0 0
  %217 = vperm.xlu0 %216, %v63
  %v218 = vpop.permute.xlu0 %217
  %219 = vset.pattern.permute.xlu0 0
  %220 = vperm.xlu0 %219, %v64
  %v221 = vpop.permute.xlu0 %220
  %222 = vset.pattern.permute.xlu0 0
  %223 = vperm.xlu0 %222, %v65
  %v224 = vpop.permute.xlu0 %223
  %225 = vset.pattern.permute.xlu0 0
  %226 = vperm.xlu0 %225, %v66
  %v227 = vpop.permute.xlu0 %226
  %228 = vset.pattern.permute.xlu0 0
  %229 = vperm.xlu0 %228, %v67
  %v230 = vpop.permute.xlu0 %229
  %231 = vset.pattern.permute.xlu0 0
  %232 = vperm.xlu0 %231, %v68
  %v233 = vpop.permute.xlu0 %232
  %234 = vset.pattern.permute.xlu0 0
  %235 = vperm.xlu0 %234, %v69
  %v236 = vpop.permute.xlu0 %235
  %237 = vset.pattern.permute.xlu0 0
  %238 = vperm.xlu0 %237, %v70
  %v239 = vpop.permute.xlu0 %238
  %240 = vset.pattern.permute.xlu0 0
  %241 = vperm.xlu0 %240, %v71
  %v242 = vpop.permute.xlu0 %241
  %243 = vset.pattern.permute.xlu0 0
  %244 = vperm.xlu0 %243, %v72
  %v245 = vpop.permute.xlu0 %244
  %246 = vset.pattern.permute.xlu0 0
  %247 = vperm.xlu0 %246, %v73
  %v248 = vpop.permute.xlu0 %247
  %249 = vset.pattern.permute.xlu0 0
  %250 = vperm.xlu0 %249, %v74
  %v251 = vpop.permute.xlu0 %250
  %252 = vset.pattern.permute.xlu0 0
  %253 = vperm.xlu0 %252, %v75
  %v254 = vpop.permute.xlu0 %253
  %255 = vset.pattern.permute.xlu0 0
  %256 = vperm.xlu0 %255, %v76
  %v257 = vpop.permute.xlu0 %256
  %258 = vset.pattern.permute.xlu0 0
  %259 = vperm.xlu0 %258, %v77
  %v260 = vpop.permute.xlu0 %259
  %261 = vset.pattern.permute.xlu0 0
  %262 = vperm.xlu0 %261, %v78
  %v263 = vpop.permute.xlu0 %262
  %264 = vset.pattern.permute.xlu0 0
  %265 = vperm.xlu0 %264, %v79
  %v266 = vpop.permute.xlu0 %265
  %267 = vset.pattern.permute.xlu0 0
  %268 = vperm.xlu0 %267, %v80
  %v269 = vpop.permute.xlu0 %268
  %270 = vset.pattern.permute.xlu0 0
  %271 = vperm.xlu0 %270, %v81
  %v272 = vpop.permute.xlu0 %271
  %273 = vset.pattern.permute.xlu0 0
  %274 = vperm.xlu0 %273, %v82
  %v275 = vpop.permute.xlu0 %274
  %276 = vset.pattern.permute.xlu0 0
  %277 = vperm.xlu0 %276, %v83
  %v278 = vpop.permute.xlu0 %277
  %vm279 = vcmp.eq.s32.totalorder %v89, %v86
  %vm280 = vcmp.eq.s32.totalorder %v92, %v86
  %vm281 = vcmp.eq.s32.totalorder %v95, %v86
  %vm282 = vcmp.eq.s32.totalorder %v98, %v86
  %vm283 = vcmp.eq.s32.totalorder %v101, %v86
  %vm284 = vcmp.eq.s32.totalorder %v104, %v86
  %vm285 = vcmp.eq.s32.totalorder %v107, %v86
  %vm286 = vcmp.eq.s32.totalorder %v110, %v86
  %vm287 = vcmp.eq.s32.totalorder %v113, %v86
  %vm288 = vcmp.eq.s32.totalorder %v116, %v86
  %vm289 = vcmp.eq.s32.totalorder %v119, %v86
  %vm290 = vcmp.eq.s32.totalorder %v122, %v86
  %vm291 = vcmp.eq.s32.totalorder %v125, %v86
  %vm292 = vcmp.eq.s32.totalorder %v128, %v86
  %vm293 = vcmp.eq.s32.totalorder %v131, %v86
  %vm294 = vcmp.eq.s32.totalorder %v134, %v86
  %vm295 = vcmp.eq.s32.totalorder %v137, %v86
  %vm296 = vcmp.eq.s32.totalorder %v140, %v86
  %vm297 = vcmp.eq.s32.totalorder %v143, %v86
  %vm298 = vcmp.eq.s32.totalorder %v146, %v86
  %vm299 = vcmp.eq.s32.totalorder %v149, %v86
  %vm300 = vcmp.eq.s32.totalorder %v152, %v86
  %vm301 = vcmp.eq.s32.totalorder %v155, %v86
  %vm302 = vcmp.eq.s32.totalorder %v158, %v86
  %vm303 = vcmp.eq.s32.totalorder %v161, %v86
  %vm304 = vcmp.eq.s32.totalorder %v164, %v86
  %vm305 = vcmp.eq.s32.totalorder %v167, %v86
  %vm306 = vcmp.eq.s32.totalorder %v170, %v86
  %vm307 = vcmp.eq.s32.totalorder %v173, %v86
  %vm308 = vcmp.eq.s32.totalorder %v176, %v86
  %vm309 = vcmp.eq.s32.totalorder %v179, %v86
  %vm310 = vcmp.eq.s32.totalorder %v182, %v86
  %vm311 = vcmp.eq.s32.totalorder %v185, %v86
  %vm312 = vcmp.eq.s32.totalorder %v188, %v86
  %vm313 = vcmp.eq.s32.totalorder %v191, %v86
  %vm314 = vcmp.eq.s32.totalorder %v194, %v86
  %vm315 = vcmp.eq.s32.totalorder %v197, %v86
  %vm316 = vcmp.eq.s32.totalorder %v200, %v86
  %vm317 = vcmp.eq.s32.totalorder %v203, %v86
  %vm318 = vcmp.eq.s32.totalorder %v206, %v86
  %vm319 = vcmp.eq.s32.totalorder %v209, %v86
  %vm320 = vcmp.eq.s32.totalorder %v212, %v86
  %vm321 = vcmp.eq.s32.totalorder %v215, %v86
  %vm322 = vcmp.eq.s32.totalorder %v218, %v86
  %vm323 = vcmp.eq.s32.totalorder %v221, %v86
  %vm324 = vcmp.eq.s32.totalorder %v224, %v86
  %vm325 = vcmp.eq.s32.totalorder %v227, %v86
  %vm326 = vcmp.eq.s32.totalorder %v230, %v86
  %vm327 = vcmp.eq.s32.totalorder %v233, %v86
  %vm328 = vcmp.eq.s32.totalorder %v236, %v86
  %vm329 = vcmp.eq.s32.totalorder %v239, %v86
  %vm330 = vcmp.eq.s32.totalorder %v242, %v86
  %vm331 = vcmp.eq.s32.totalorder %v245, %v86
  %vm332 = vcmp.eq.s32.totalorder %v248, %v86
  %vm333 = vcmp.eq.s32.totalorder %v251, %v86
  %vm334 = vcmp.eq.s32.totalorder %v254, %v86
  %vm335 = vcmp.eq.s32.totalorder %v257, %v86
  %vm336 = vcmp.eq.s32.totalorder %v260, %v86
  %vm337 = vcmp.eq.s32.totalorder %v263, %v86
  %vm338 = vcmp.eq.s32.totalorder %v266, %v86
  %vm339 = vcmp.eq.s32.totalorder %v269, %v86
  %vm340 = vcmp.eq.s32.totalorder %v272, %v86
  %vm341 = vcmp.eq.s32.totalorder %v275, %v86
  %vm342 = vcmp.eq.s32.totalorder %v278, %v86
  %v343 = vsel %vm279, 1, 0
  %v344 = vsel %vm280, 1, 0
  %v345 = vsel %vm281, 1, 0
  %v346 = vsel %vm282, 1, 0
  %v347 = vsel %vm283, 1, 0
  %v348 = vsel %vm284, 1, 0
  %v349 = vsel %vm285, 1, 0
  %v350 = vsel %vm286, 1, 0
  %v351 = vsel %vm287, 1, 0
  %v352 = vsel %vm288, 1, 0
  %v353 = vsel %vm289, 1, 0
  %v354 = vsel %vm290, 1, 0
  %v355 = vsel %vm291, 1, 0
  %v356 = vsel %vm292, 1, 0
  %v357 = vsel %vm293, 1, 0
  %v358 = vsel %vm294, 1, 0
  %v359 = vsel %vm295, 1, 0
  %v360 = vsel %vm296, 1, 0
  %v361 = vsel %vm297, 1, 0
  %v362 = vsel %vm298, 1, 0
  %v363 = vsel %vm299, 1, 0
  %v364 = vsel %vm300, 1, 0
  %v365 = vsel %vm301, 1, 0
  %v366 = vsel %vm302, 1, 0
  %v367 = vsel %vm303, 1, 0
  %v368 = vsel %vm304, 1, 0
  %v369 = vsel %vm305, 1, 0
  %v370 = vsel %vm306, 1, 0
  %v371 = vsel %vm307, 1, 0
  %v372 = vsel %vm308, 1, 0
  %v373 = vsel %vm309, 1, 0
  %v374 = vsel %vm310, 1, 0
  %v375 = vsel %vm311, 1, 0
  %v376 = vsel %vm312, 1, 0
  %v377 = vsel %vm313, 1, 0
  %v378 = vsel %vm314, 1, 0
  %v379 = vsel %vm315, 1, 0
  %v380 = vsel %vm316, 1, 0
  %v381 = vsel %vm317, 1, 0
  %v382 = vsel %vm318, 1, 0
  %v383 = vsel %vm319, 1, 0
  %v384 = vsel %vm320, 1, 0
  %v385 = vsel %vm321, 1, 0
  %v386 = vsel %vm322, 1, 0
  %v387 = vsel %vm323, 1, 0
  %v388 = vsel %vm324, 1, 0
  %v389 = vsel %vm325, 1, 0
  %v390 = vsel %vm326, 1, 0
  %v391 = vsel %vm327, 1, 0
  %v392 = vsel %vm328, 1, 0
  %v393 = vsel %vm329, 1, 0
  %v394 = vsel %vm330, 1, 0
  %v395 = vsel %vm331, 1, 0
  %v396 = vsel %vm332, 1, 0
  %v397 = vsel %vm333, 1, 0
  %v398 = vsel %vm334, 1, 0
  %v399 = vsel %vm335, 1, 0
  %v400 = vsel %vm336, 1, 0
  %v401 = vsel %vm337, 1, 0
  %v402 = vsel %vm338, 1, 0
  %v403 = vsel %vm339, 1, 0
  %v404 = vsel %vm340, 1, 0
  %v405 = vsel %vm341, 1, 0
  %v406 = vsel %vm342, 1, 0
  %v407 = vcvt.s32.f32 %v343
  %v408 = vcvt.s32.f32 %v344
  %v409 = vcvt.s32.f32 %v345
  %v410 = vcvt.s32.f32 %v346
  %v411 = vcvt.s32.f32 %v347
  %v412 = vcvt.s32.f32 %v348
  %v413 = vcvt.s32.f32 %v349
  %v414 = vcvt.s32.f32 %v350
  %v415 = vcvt.s32.f32 %v351
  %v416 = vcvt.s32.f32 %v352
  %v417 = vcvt.s32.f32 %v353
  %v418 = vcvt.s32.f32 %v354
  %v419 = vcvt.s32.f32 %v355
  %v420 = vcvt.s32.f32 %v356
  %v421 = vcvt.s32.f32 %v357
  %v422 = vcvt.s32.f32 %v358
  %v423 = vcvt.s32.f32 %v359
  %v424 = vcvt.s32.f32 %v360
  %v425 = vcvt.s32.f32 %v361
  %v426 = vcvt.s32.f32 %v362
  %v427 = vcvt.s32.f32 %v363
  %v428 = vcvt.s32.f32 %v364
  %v429 = vcvt.s32.f32 %v365
  %v430 = vcvt.s32.f32 %v366
  %v431 = vcvt.s32.f32 %v367
  %v432 = vcvt.s32.f32 %v368
  %v433 = vcvt.s32.f32 %v369
  %v434 = vcvt.s32.f32 %v370
  %v435 = vcvt.s32.f32 %v371
  %v436 = vcvt.s32.f32 %v372
  %v437 = vcvt.s32.f32 %v373
  %v438 = vcvt.s32.f32 %v374
  %v439 = vcvt.s32.f32 %v375
  %v440 = vcvt.s32.f32 %v376
  %v441 = vcvt.s32.f32 %v377
  %v442 = vcvt.s32.f32 %v378
  %v443 = vcvt.s32.f32 %v379
  %v444 = vcvt.s32.f32 %v380
  %v445 = vcvt.s32.f32 %v381
  %v446 = vcvt.s32.f32 %v382
  %v447 = vcvt.s32.f32 %v383
  %v448 = vcvt.s32.f32 %v384
  %v449 = vcvt.s32.f32 %v385
  %v450 = vcvt.s32.f32 %v386
  %v451 = vcvt.s32.f32 %v387
  %v452 = vcvt.s32.f32 %v388
  %v453 = vcvt.s32.f32 %v389
  %v454 = vcvt.s32.f32 %v390
  %v455 = vcvt.s32.f32 %v391
  %v456 = vcvt.s32.f32 %v392
  %v457 = vcvt.s32.f32 %v393
  %v458 = vcvt.s32.f32 %v394
  %v459 = vcvt.s32.f32 %v395
  %v460 = vcvt.s32.f32 %v396
  %v461 = vcvt.s32.f32 %v397
  %v462 = vcvt.s32.f32 %v398
  %v463 = vcvt.s32.f32 %v399
  %v464 = vcvt.s32.f32 %v400
  %v465 = vcvt.s32.f32 %v401
  %v466 = vcvt.s32.f32 %v402
  %v467 = vcvt.s32.f32 %v403
  %v468 = vcvt.s32.f32 %v404
  %v469 = vcvt.s32.f32 %v405
  %v470 = vcvt.s32.f32 %v406
  %v471 = vpack.c.bf16 %v408, %v407
  %v472 = vpack.c.bf16 %v410, %v409
  %v473 = vpack.c.bf16 %v412, %v411
  %v474 = vpack.c.bf16 %v414, %v413
  %v475 = vpack.c.bf16 %v416, %v415
  %v476 = vpack.c.bf16 %v418, %v417
  %v477 = vpack.c.bf16 %v420, %v419
  %v478 = vpack.c.bf16 %v422, %v421
  %v479 = vpack.c.bf16 %v424, %v423
  %v480 = vpack.c.bf16 %v426, %v425
  %v481 = vpack.c.bf16 %v428, %v427
  %v482 = vpack.c.bf16 %v430, %v429
  %v483 = vpack.c.bf16 %v432, %v431
  %v484 = vpack.c.bf16 %v434, %v433
  %v485 = vpack.c.bf16 %v436, %v435
  %v486 = vpack.c.bf16 %v438, %v437
  %v487 = vpack.c.bf16 %v440, %v439
  %v488 = vpack.c.bf16 %v442, %v441
  %v489 = vpack.c.bf16 %v444, %v443
  %v490 = vpack.c.bf16 %v446, %v445
  %v491 = vpack.c.bf16 %v448, %v447
  %v492 = vpack.c.bf16 %v450, %v449
  %v493 = vpack.c.bf16 %v452, %v451
  %v494 = vpack.c.bf16 %v454, %v453
  %v495 = vpack.c.bf16 %v456, %v455
  %v496 = vpack.c.bf16 %v458, %v457
  %v497 = vpack.c.bf16 %v460, %v459
  %v498 = vpack.c.bf16 %v462, %v461
  %v499 = vpack.c.bf16 %v464, %v463
  %v500 = vpack.c.bf16 %v466, %v465
  %v501 = vpack.c.bf16 %v468, %v467
  %v502 = vpack.c.bf16 %v470, %v469
  %v503 = vlaneseq
  %v504 = vshrl.u32 %v503, 7
  %v505 = vlaneseq
  %v506 = vshrl.u32 %v505, 7
  %v507 = vsub.s32 0, %v506
  %v508 = vrot.slane %v84, %v507
  %v509 = vlaneseq
  %v510 = vshrl.u32 %v509, 7
  %v511 = vsub.s32 1, %v510
  %v512 = vrot.slane %v84, %v511
  %v513 = vlaneseq
  %v514 = vshrl.u32 %v513, 7
  %v515 = vsub.s32 2, %v514
  %v516 = vrot.slane %v84, %v515
  %v517 = vlaneseq
  %v518 = vshrl.u32 %v517, 7
  %v519 = vsub.s32 3, %v518
  %v520 = vrot.slane %v84, %v519
  %vm521 = vcmp.eq.s32.totalorder %v508, %v504
  %vm522 = vcmp.eq.s32.totalorder %v512, %v504
  %vm523 = vcmp.eq.s32.totalorder %v516, %v504
  %vm524 = vcmp.eq.s32.totalorder %v520, %v504
  %v525 = vsel %vm521, 1, 0
  %v526 = vsel %vm522, 1, 0
  %v527 = vsel %vm523, 1, 0
  %v528 = vsel %vm524, 1, 0
  %v529 = vcvt.s32.f32 %v525
  %v530 = vcvt.s32.f32 %v526
  %v531 = vcvt.s32.f32 %v527
  %v532 = vcvt.s32.f32 %v528
  %v533 = vpack.c.bf16 %v529, %v529
  %v534 = vpack.c.bf16 %v530, %v530
  %v535 = vpack.c.bf16 %v531, %v531
  %v536 = vpack.c.bf16 %v532, %v532
  %v537 = vld [vmem:[#allocation2] sm:$0xff]
  %538 = vmatprep.subr.bf16.mxu0 0
  %539 = vmatpush1.bf16.msra.mxu0 %v478
  %540 = vmatprep.subr.bf16.mxu0 0
  %541 = vmatpush1.bf16.msra.mxu0 %v477
  %542 = vmatprep.subr.bf16.mxu0 0
  %543 = vmatpush1.bf16.msra.mxu0 %v476
  %544 = vmatprep.subr.bf16.mxu0 0
  %545 = vmatpush1.bf16.msra.mxu0 %v475
  %546 = vmatprep.subr.bf16.mxu0 0
  %547 = vmatpush1.bf16.msra.mxu0 %v474
  %548 = vmatprep.subr.bf16.mxu0 0
  %549 = vmatpush1.bf16.msra.mxu0 %v473
  %550 = vmatprep.subr.bf16.mxu0 0
  %551 = vmatpush1.bf16.msra.mxu0 %v472
  %552 = vmatprep.subr.bf16.mxu0 0
  %553 = vmatpush1.bf16.msra.mxu0 %v471
  %554 = vmatprep.subr.bf16.mxu0 0
  %555 = vmatpush2.bf16.msra.mxu0 %v486
  %556 = vmatprep.subr.bf16.mxu0 0
  %557 = vmatpush2.bf16.msra.mxu0 %v485
  %558 = vmatprep.subr.bf16.mxu0 0
  %559 = vmatpush2.bf16.msra.mxu0 %v484
  %560 = vmatprep.subr.bf16.mxu0 0
  %561 = vmatpush2.bf16.msra.mxu0 %v483
  %562 = vmatprep.subr.bf16.mxu0 0
  %563 = vmatpush2.bf16.msra.mxu0 %v482
  %564 = vmatprep.subr.bf16.mxu0 0
  %565 = vmatpush2.bf16.msra.mxu0 %v481
  %566 = vmatprep.subr.bf16.mxu0 0
  %567 = vmatpush2.bf16.msra.mxu0 %v480
  %568 = vmatprep.subr.bf16.mxu0 0
  %569 = vmatpush2.bf16.msra.mxu0 %v479
  %570 = vmatprep.mubr.bf16.mxu0 %v534
  %571 = vmatmul.mubr.bf16.gmra.mxu0 %v533
  %v572 = vpop.f32.mrf.mxu0
  %v573 = vadd.f32 0.0, %v572
  %v574 = vpop.f32.mrf.mxu0
  %v575 = vpop.f32.mrf.mxu0
  %v576 = vpop.f32.mrf.mxu0
  %577 = vdwg.mxu0
  %578 = vmatprep.subr.bf16.mxu0 0
  %579 = vmatpush1.bf16.msra.mxu0 %v494
  %580 = vmatprep.subr.bf16.mxu0 0
  %581 = vmatpush1.bf16.msra.mxu0 %v493
  %582 = vmatprep.subr.bf16.mxu0 0
  %583 = vmatpush1.bf16.msra.mxu0 %v492
  %584 = vmatprep.subr.bf16.mxu0 0
  %585 = vmatpush1.bf16.msra.mxu0 %v491
  %586 = vmatprep.subr.bf16.mxu0 0
  %587 = vmatpush1.bf16.msra.mxu0 %v490
  %588 = vmatprep.subr.bf16.mxu0 0
  %589 = vmatpush1.bf16.msra.mxu0 %v489
  %590 = vmatprep.subr.bf16.mxu0 0
  %591 = vmatpush1.bf16.msra.mxu0 %v488
  %592 = vmatprep.subr.bf16.mxu0 0
  %593 = vmatpush1.bf16.msra.mxu0 %v487
  %594 = vmatprep.subr.bf16.mxu0 0
  %595 = vmatpush2.bf16.msra.mxu0 %v502
  %596 = vmatprep.subr.bf16.mxu0 0
  %597 = vmatpush2.bf16.msra.mxu0 %v501
  %598 = vmatprep.subr.bf16.mxu0 0
  %599 = vmatpush2.bf16.msra.mxu0 %v500
  %600 = vmatprep.subr.bf16.mxu0 0
  %601 = vmatpush2.bf16.msra.mxu0 %v499
  %602 = vmatprep.subr.bf16.mxu0 0
  %603 = vmatpush2.bf16.msra.mxu0 %v498
  %604 = vmatprep.subr.bf16.mxu0 0
  %605 = vmatpush2.bf16.msra.mxu0 %v497
  %606 = vmatprep.subr.bf16.mxu0 0
  %607 = vmatpush2.bf16.msra.mxu0 %v496
  %608 = vmatprep.subr.bf16.mxu0 0
  %609 = vmatpush2.bf16.msra.mxu0 %v495
  %610 = vmatprep.mubr.bf16.mxu0 %v536
  %611 = vmatmul.mubr.bf16.gmra.mxu0 %v535
  %v612 = vpop.f32.mrf.mxu0
  %v613 = vadd.f32 %v573, %v612
  %v614 = vpop.f32.mrf.mxu0
  %v615 = vpop.f32.mrf.mxu0
  %v616 = vpop.f32.mrf.mxu0
  %617 = vdwg.mxu0
  %v618 = vadd.f32 %v537, %v613
  %619 = vst [vmem:[#allocation2] sm:$0xff] %v618
  // Predicated region
  $region18: #{atom_ref_forward.1} parent=0 // pred_check
    %p620 = pneg %p15
  $region19: #{atom_ref_forward.1} parent=0 // pred_check_branch
    %622 = sbr.rel (%p620) target = $region21
  $region20: #{atom_ref_forward.1} parent=0 // pred_region
    %v623 = vld [vmem:[%s2] sm:$0x1]
    %v624 = vld [vmem:[#allocation2] sm:$0xff]
    %625 = vmatprep.subr.mxu0 0.0
    %626 = vmatpush1.xpose.msra.mxu0 0.0
    %627 = vmatprep.subr.mxu0 0.0
    %628 = vmatpush1.xpose.msra.mxu0 0.0
    %629 = vmatprep.subr.mxu0 0.0
    %630 = vmatpush1.xpose.msra.mxu0 0.0
    %631 = vmatprep.subr.mxu0 0.0
    %632 = vmatpush1.xpose.msra.mxu0 0.0
    %633 = vmatprep.subr.mxu0 0.0
    %634 = vmatpush1.xpose.msra.mxu0 0.0
    %635 = vmatprep.subr.mxu0 0.0
    %636 = vmatpush1.xpose.msra.mxu0 0.0
    %637 = vmatprep.subr.mxu0 0.0
    %638 = vmatpush1.xpose.msra.mxu0 0.0
    %639 = vmatprep.subr.mxu0 0.0
    %640 = vmatpush1.xpose.msra.mxu0 0.0
    %641 = vmatprep.subr.mxu0 0.0
    %642 = vmatpush1.xpose.msra.mxu0 0.0
    %643 = vmatprep.subr.mxu0 0.0
    %644 = vmatpush1.xpose.msra.mxu0 0.0
    %645 = vmatprep.subr.mxu0 0.0
    %646 = vmatpush1.xpose.msra.mxu0 0.0
    %647 = vmatprep.subr.mxu0 0.0
    %648 = vmatpush1.xpose.msra.mxu0 0.0
    %649 = vmatprep.subr.mxu0 0.0
    %650 = vmatpush1.xpose.msra.mxu0 0.0
    %651 = vmatprep.subr.mxu0 0.0
    %652 = vmatpush1.xpose.msra.mxu0 0.0
    %653 = vmatprep.subr.mxu0 0.0
    %654 = vmatpush1.xpose.msra.mxu0 0.0
    %655 = vmatprep.subr.mxu0 0.0
    %656 = vmatpush1.xpose.msra.mxu0 %v624
    %657 = vmatprep.subr.mxu0 0.0
    %658 = vmatpush2.xpose.msra.mxu0 0.0
    %659 = vmatprep.subr.mxu0 0.0
    %660 = vmatpush2.xpose.msra.mxu0 0.0
    %661 = vmatprep.subr.mxu0 0.0
    %662 = vmatpush2.xpose.msra.mxu0 0.0
    %663 = vmatprep.subr.mxu0 0.0
    %664 = vmatpush2.xpose.msra.mxu0 0.0
    %665 = vmatprep.subr.mxu0 0.0
    %666 = vmatpush2.xpose.msra.mxu0 0.0
    %667 = vmatprep.subr.mxu0 0.0
    %668 = vmatpush2.xpose.msra.mxu0 0.0
    %669 = vmatprep.subr.mxu0 0.0
    %670 = vmatpush2.xpose.msra.mxu0 0.0
    %671 = vmatprep.subr.mxu0 0.0
    %672 = vmatpush2.xpose.msra.mxu0 0.0
    %673 = vmatprep.subr.mxu0 0.0
    %674 = vmatpush2.xpose.msra.mxu0 0.0
    %675 = vmatprep.subr.mxu0 0.0
    %676 = vmatpush2.xpose.msra.mxu0 0.0
    %677 = vmatprep.subr.mxu0 0.0
    %678 = vmatpush2.xpose.msra.mxu0 0.0
    %679 = vmatprep.subr.mxu0 0.0
    %680 = vmatpush2.xpose.msra.mxu0 0.0
    %681 = vmatprep.subr.mxu0 0.0
    %682 = vmatpush2.xpose.msra.mxu0 0.0
    %683 = vmatprep.subr.mxu0 0.0
    %684 = vmatpush2.xpose.msra.mxu0 0.0
    %685 = vmatprep.subr.mxu0 0.0
    %686 = vmatpush2.xpose.msra.mxu0 0.0
    %687 = vmatprep.subr.mxu0 0.0
    %688 = vmatpush2.xpose.msra.mxu0 0.0
    %689 = vmatprep.mubr.f32.mxu0 0.0
    %690 = vmatmul.mubr.f32.gmra.mxu0 %v623
    %v691 = vpop.f32.mrf.mxu0
    %v692 = vadd.f32 0.0, %v691
    %v693 = vpop.f32.mrf.mxu0
    %694 = vdwg.mxu0
    %vm695 = vcmask 57344
    %696 = vst.msk [vmem:[%s3] sm:$0x1] %vm695, %v692
  $region21: #{atom_ref_forward.1} parent=0 // pred_fallthru
    _
  // Predicated region
  $region22: #{atom_ref_forward.1} parent=0 // pred_check
    _
  $region23: #{atom_ref_forward.1} parent=0 // pred_check_branch
    %698 = sbr.rel (0) target = $region25
  $region24: #{atom_ref_forward.1} parent=0 // pred_region
    _
  $region25: #{atom_ref_forward.1} parent=0 // pred_fallthru
    _
  // Predicated region
  $region26: #{atom_ref_forward.1} parent=0 // pred_check
    _
  $region27: #{atom_ref_forward.1} parent=0 // pred_check_branch
    %700 = sbr.rel (0) target = $region29
  $region28: #{atom_ref_forward.1} parent=0 // pred_region
    _
  $region29: #{atom_ref_forward.1} parent=0 // pred_fallthru
    _

</llo_original>
